<compile_context>
chip_gen: v5e
topology: v5e:2x2
jax: 0.10.0
libtpu: 0.0.40
codegen_flags: <defaults>
</compile_context>

<pallas_src>
import jax
import jax.numpy as jnp
from jax.experimental import pallas as pl
from jax.experimental.pallas import tpu as pltpu

# Problem dimensions implied by the module (Linear expects 16 * 8 * 8 inputs).
B = 2
CIN = 3
C = 16                    # conv channels (conv1's input channels zero-padded 3 -> 16)
H = W = 8
HP = WP = H + 2           # zero-padded spatial extent (padding=1)
SP = HP * WP              # 100 padded positions per image
LSPAN = B * SP            # 200 activation lanes: layout (C, B*HP*WP)
KH = KW = 3
NOUT = 10

PAD_OFF = (KH // 2) * WP + (KW // 2)            # 11: margin so every conv tap is a plain slice
BUF_W = PAD_OFF + LSPAN + PAD_OFF + 2           # 224 buffer lanes
TAP_OFFSETS = tuple(PAD_OFF + (kh - 1) * WP + (kw - 1)
                    for kh in range(KH) for kw in range(KW))    # 0,1,2,10,11,12,20,21,22

_VMEM = pl.BlockSpec(memory_space=pltpu.MemorySpace.VMEM)


# ------------------------------- kernel ------------------------------------ #

def fused_forward_kernel(x_ref, w1_ref, b1_ref, w2_ref, b2_ref, wfc_ref, bfc_ref,
                         mask_ref, o_ref, buf_ref):
    # x_ref   : (C, BUF_W)     padded input already placed at lanes [PAD_OFF, PAD_OFF+LSPAN)
    # w1_ref  : (C, 9*C)       conv1 weight, col = (kh*3+kw)*16 + ci (ci zero-padded 3 -> 16)
    # b1_ref  : (C, 1)
    # w2_ref  : (C, 9*C)       conv2 weight (used for both the 2nd and 3rd conv)
    # b2_ref  : (C, 1)
    # wfc_ref : (NOUT, C, SP)  FC weight, torch NCHW flatten order baked in, zero at pad lanes
    # bfc_ref : (1, NOUT)
    # mask_ref: (1, LSPAN)     1.0 at interior (non-pad) lanes of each batch block
    # o_ref   : (B, NOUT)
    # buf_ref : (C, BUF_W)     activation scratch reused by all three convs

    def conv3x3_relu(w_ref, b_ref):
        # 9 constant-offset tap slices, stacked along sublanes (tile-aligned, no relayout)
        # -> ONE (16,144) @ (144,200) MXU matmul.
        stack = jnp.concatenate(
            [buf_ref[:, off:off + LSPAN] for off in TAP_OFFSETS], axis=0)    # (144, 200)
        y = jnp.dot(w_ref[...], stack, preferred_element_type=jnp.float32)   # (16, 200)
        return jnp.maximum(y + b_ref[...], 0.0)                              # fused bias + ReLU

    mask = mask_ref[...]                                        # (1, LSPAN)

    buf_ref[...] = x_ref[...]                                   # padded input (+ zero margins)
    y = conv3x3_relu(w1_ref, b1_ref)                            # conv1 + ReLU
    buf_ref[:, PAD_OFF:PAD_OFF + LSPAN] = y * mask              # keep pad lanes exactly zero
    y = conv3x3_relu(w2_ref, b2_ref)                            # conv2 + ReLU
    buf_ref[:, PAD_OFF:PAD_OFF + LSPAN] = y * mask
    y = conv3x3_relu(w2_ref, b2_ref)                            # conv2 (reused) + ReLU
    # no masking needed here: the FC weight is zero at pad lanes.

    # FC: out[b, o] = sum_{c, s} y[c, b*SP + s] * wfc[o, c, s] + bfc[o]
    rows = []
    for b in range(B):
        yb = y[:, b * SP:(b + 1) * SP]                          # (16, 100)
        prod = yb[None, :, :] * wfc_ref[...]                    # (10, 16, 100)  VPU
        rows.append(prod.sum(axis=2).sum(axis=1).reshape(1, NOUT))   # lane then sublane reduce
    o_ref[...] = (jnp.concatenate(rows, axis=0) + bfc_ref[...]).astype(o_ref.dtype)


# ------------------------------ wrappers ------------------------------------ #

@jax.jit
def test_model_forward(x_nchw, kp):
    # x_nchw: (B, 3, 8, 8) float32, PyTorch layout.  Pure layout plumbing (no compute):
    # zero-pad spatial, channels -> sublanes, batch*padded-spatial -> lanes, add slice margins.
    xp = jnp.pad(x_nchw, ((0, 0), (0, 0), (1, 1), (1, 1)))                  # (B, 3, 10, 10)
    xl = jnp.transpose(xp, (1, 0, 2, 3)).reshape(CIN, LSPAN)                # (3, 200)
    x_buf = jnp.pad(xl, ((0, C - CIN), (PAD_OFF, BUF_W - PAD_OFF - LSPAN))) # (16, 224)
    return pl.pallas_call(
        fused_forward_kernel,
        out_shape=jax.ShapeDtypeStruct((B, NOUT), jnp.float32),
        in_specs=[_VMEM] * 8,
        out_specs=_VMEM,
        scratch_shapes=[pltpu.VMEM((C, BUF_W), jnp.float32)],
    )(x_buf, kp["w1"], kp["b1"], kp["w2"], kp["b2"], kp["wfc"], kp["bfc"], kp["mask"])


def init_torch_params(key):
    """Parameters in PyTorch-native layouts (OIHW conv weights, (out, in) fc weight)."""
    k = jax.random.split(key, 6)
    return {
        "w1": 0.1 * jax.random.normal(k[0], (16, 3, 3, 3), jnp.float32),        # OIHW
        "b1": 0.1 * jax.random.normal(k[1], (16,), jnp.float32),
        "w2": 0.05 * jax.random.normal(k[2], (16, 16, 3, 3), jnp.float32),       # OIHW
        "b2": 0.05 * jax.random.normal(k[3], (16,), jnp.float32),
        "wfc": 0.02 * jax.random.normal(k[4], (10, 16 * 8 * 8), jnp.float32),    # (out, in)
        "bfc": 0.02 * jax.random.normal(k[5], (10,), jnp.float32),
    }


def prepare_kernel_params(p):
    """One-time layout conversion of PyTorch-native params (off the hot path)."""
    def conv_weight(w_oihw, cin):
        # OIHW -> (kh, kw, ci, co), zero-pad ci -> 16, flatten taps -> (co, (kh*3+kw)*16 + ci)
        wt = jnp.transpose(w_oihw, (2, 3, 1, 0))
        wt = jnp.pad(wt, ((0, 0), (0, 0), (0, C - cin), (0, 0)))
        return wt.reshape(KH * KW * C, C).T                                 # (16, 144)

    # FC weight: (out, c*64 + y*8 + x) -> (out, c, padded spatial (y+1)*10+(x+1)); zero at pads.
    wfc = p["wfc"].reshape(NOUT, C, H, W)
    wfc = jnp.pad(wfc, ((0, 0), (0, 0), (1, 1), (1, 1))).reshape(NOUT, C, SP)

    # Interior (non-pad) mask over the (batch, padded-spatial) lane axis.
    yy, xx = jnp.meshgrid(jnp.arange(HP), jnp.arange(WP), indexing="ij")
    interior = ((yy >= 1) & (yy <= H) & (xx >= 1) & (xx <= W)).astype(jnp.float32)
    mask = jnp.tile(interior.reshape(1, SP), (1, B))                        # (1, 200)

    return {"w1": conv_weight(p["w1"], CIN), "b1": p["b1"].reshape(C, 1),
            "w2": conv_weight(p["w2"], C),   "b2": p["b2"].reshape(C, 1),
            "wfc": wfc, "bfc": p["bfc"].reshape(1, NOUT), "mask": mask}


def reference_forward(x, p):
    """Pure-JAX reference with the exact PyTorch semantics (f32 precision)."""
    hi = jax.lax.Precision.HIGHEST

    def conv(a, w, b):
        y = jax.lax.conv_general_dilated(a, w, (1, 1), ((1, 1), (1, 1)),
                                         dimension_numbers=("NCHW", "OIHW", "NCHW"),
                                         precision=hi)
        return jax.nn.relu(y + b.reshape(1, -1, 1, 1))

    y = conv(x, p["w1"], p["b1"])
    y = conv(y, p["w2"], p["b2"])
    y = conv(y, p["w2"], p["b2"])
    y = y.reshape(y.shape[0], -1)
    return jnp.dot(y, p["wfc"].T, precision=hi) + p["bfc"]


if __name__ == "__main__":
    key = jax.random.PRNGKey(0)
    kx, kparam = jax.random.split(key)
    x = jax.random.normal(kx, (B, CIN, H, W), jnp.float32)      # NCHW, like PyTorch
    torch_params = init_torch_params(kparam)
    params = prepare_kernel_params(torch_params)

    out = test_model_forward(x, params)
    out = jax.block_until_ready(out)
    assert out.shape == (B, NOUT) and out.dtype == jnp.float32

    ref = reference_forward(x, torch_params)
    assert jnp.allclose(out, ref, rtol=2e-2, atol=2e-2), "mismatch vs pure-JAX reference"

    print("KERNEL_OK")
</pallas_src>

<mosaic_0001>
module attributes {stable_mosaic.version = 11 : i64} {
  func.func @fused_forward_kernel(%arg0: memref<16x224xf32, #tpu.memory_space<vmem>>, %arg1: memref<16x144xf32, #tpu.memory_space<vmem>>, %arg2: memref<16x1xf32, #tpu.memory_space<vmem>>, %arg3: memref<16x144xf32, #tpu.memory_space<vmem>>, %arg4: memref<16x1xf32, #tpu.memory_space<vmem>>, %arg5: memref<10x16x100xf32, #tpu.memory_space<vmem>>, %arg6: memref<1x10xf32, #tpu.memory_space<vmem>>, %arg7: memref<1x200xf32, #tpu.memory_space<vmem>>, %arg8: memref<2x10xf32, #tpu.memory_space<vmem>>, %arg9: memref<16x224xf32, #tpu.memory_space<vmem>>) attributes {dimension_semantics = [], scalar_prefetch = 0 : i64, scratch_operands = 1 : i64, tpu.core_type = #tpu.core_type<tc>} {
    %c0 = arith.constant 0 : index
    %c0_0 = arith.constant 0 : index
    %0 = vector.load %arg7[%c0, %c0_0] : memref<1x200xf32, #tpu.memory_space<vmem>>, vector<1x200xf32>
    %c0_1 = arith.constant 0 : index
    %c0_2 = arith.constant 0 : index
    %1 = vector.load %arg0[%c0_1, %c0_2] : memref<16x224xf32, #tpu.memory_space<vmem>>, vector<16x224xf32>
    %c0_3 = arith.constant 0 : index
    %c0_4 = arith.constant 0 : index
    %2 = vector.load %arg9[%c0_3, %c0_4] : memref<16x224xf32, #tpu.memory_space<vmem>>, vector<16x224xf32>
    tpu.vector_store %arg9[%c0_3, %c0_4], %1 {strides = array<i32>} : memref<16x224xf32, #tpu.memory_space<vmem>>, vector<16x224xf32>,
    %c0_5 = arith.constant 0 : index
    %c0_6 = arith.constant 0 : index
    %3 = vector.load %arg9[%c0_5, %c0_6] : memref<16x224xf32, #tpu.memory_space<vmem>>, vector<16x200xf32>
    %c0_7 = arith.constant 0 : index
    %c1 = arith.constant 1 : index
    %4 = vector.load %arg9[%c0_7, %c1] : memref<16x224xf32, #tpu.memory_space<vmem>>, vector<16x200xf32>
    %c0_8 = arith.constant 0 : index
    %c2 = arith.constant 2 : index
    %5 = vector.load %arg9[%c0_8, %c2] : memref<16x224xf32, #tpu.memory_space<vmem>>, vector<16x200xf32>
    %c0_9 = arith.constant 0 : index
    %c10 = arith.constant 10 : index
    %6 = vector.load %arg9[%c0_9, %c10] : memref<16x224xf32, #tpu.memory_space<vmem>>, vector<16x200xf32>
    %c0_10 = arith.constant 0 : index
    %c11 = arith.constant 11 : index
    %7 = vector.load %arg9[%c0_10, %c11] : memref<16x224xf32, #tpu.memory_space<vmem>>, vector<16x200xf32>
    %c0_11 = arith.constant 0 : index
    %c12 = arith.constant 12 : index
    %8 = vector.load %arg9[%c0_11, %c12] : memref<16x224xf32, #tpu.memory_space<vmem>>, vector<16x200xf32>
    %c0_12 = arith.constant 0 : index
    %c20 = arith.constant 20 : index
    %9 = vector.load %arg9[%c0_12, %c20] : memref<16x224xf32, #tpu.memory_space<vmem>>, vector<16x200xf32>
    %c0_13 = arith.constant 0 : index
    %c21 = arith.constant 21 : index
    %10 = vector.load %arg9[%c0_13, %c21] : memref<16x224xf32, #tpu.memory_space<vmem>>, vector<16x200xf32>
    %c0_14 = arith.constant 0 : index
    %c22 = arith.constant 22 : index
    %11 = vector.load %arg9[%c0_14, %c22] : memref<16x224xf32, #tpu.memory_space<vmem>>, vector<16x200xf32>
    %12 = tpu.concatenate %3, %4, %5, %6, %7, %8, %9, %10, %11 in 0 : vector<16x200xf32>, vector<16x200xf32>, vector<16x200xf32>, vector<16x200xf32>, vector<16x200xf32>, vector<16x200xf32>, vector<16x200xf32>, vector<16x200xf32>, vector<16x200xf32> -> vector<144x200xf32>
    %c0_15 = arith.constant 0 : index
    %c0_16 = arith.constant 0 : index
    %13 = vector.load %arg1[%c0_15, %c0_16] : memref<16x144xf32, #tpu.memory_space<vmem>>, vector<16x144xf32>
    %cst = arith.constant dense<0.000000e+00> : vector<16x200xf32>
    %14 = tpu.matmul %13, %12, %cst {dimension_numbers = #tpu.dot_dimension_numbers<[1], [0], [0], [1], [0, 0, 1, 1], [], []>} : vector<16x144xf32>, vector<144x200xf32>, vector<16x200xf32> -> vector<16x200xf32>
    %c0_17 = arith.constant 0 : index
    %c0_18 = arith.constant 0 : index
    %15 = vector.load %arg2[%c0_17, %c0_18] : memref<16x1xf32, #tpu.memory_space<vmem>>, vector<16x1xf32>
    %16 = vector.broadcast %15 : vector<16x1xf32> to vector<16x200xf32>
    %17 = arith.addf %14, %16 : vector<16x200xf32>
    %cst_19 = arith.constant 0.000000e+00 : f32
    %18 = vector.broadcast %cst_19 : f32 to vector<16x200xf32>
    %19 = arith.maximumf %17, %18 : vector<16x200xf32>
    %20 = vector.broadcast %0 : vector<1x200xf32> to vector<16x200xf32>
    %21 = arith.mulf %19, %20 : vector<16x200xf32>
    %c0_20 = arith.constant 0 : index
    %c11_21 = arith.constant 11 : index
    %22 = vector.load %arg9[%c0_20, %c11_21] : memref<16x224xf32, #tpu.memory_space<vmem>>, vector<16x200xf32>
    tpu.vector_store %arg9[%c0_20, %c11_21], %21 {strides = array<i32>} : memref<16x224xf32, #tpu.memory_space<vmem>>, vector<16x200xf32>,
    %c0_22 = arith.constant 0 : index
    %c0_23 = arith.constant 0 : index
    %23 = vector.load %arg9[%c0_22, %c0_23] : memref<16x224xf32, #tpu.memory_space<vmem>>, vector<16x200xf32>
    %c0_24 = arith.constant 0 : index
    %c1_25 = arith.constant 1 : index
    %24 = vector.load %arg9[%c0_24, %c1_25] : memref<16x224xf32, #tpu.memory_space<vmem>>, vector<16x200xf32>
    %c0_26 = arith.constant 0 : index
    %c2_27 = arith.constant 2 : index
    %25 = vector.load %arg9[%c0_26, %c2_27] : memref<16x224xf32, #tpu.memory_space<vmem>>, vector<16x200xf32>
    %c0_28 = arith.constant 0 : index
    %c10_29 = arith.constant 10 : index
    %26 = vector.load %arg9[%c0_28, %c10_29] : memref<16x224xf32, #tpu.memory_space<vmem>>, vector<16x200xf32>
    %c0_30 = arith.constant 0 : index
    %c11_31 = arith.constant 11 : index
    %27 = vector.load %arg9[%c0_30, %c11_31] : memref<16x224xf32, #tpu.memory_space<vmem>>, vector<16x200xf32>
    %c0_32 = arith.constant 0 : index
    %c12_33 = arith.constant 12 : index
    %28 = vector.load %arg9[%c0_32, %c12_33] : memref<16x224xf32, #tpu.memory_space<vmem>>, vector<16x200xf32>
    %c0_34 = arith.constant 0 : index
    %c20_35 = arith.constant 20 : index
    %29 = vector.load %arg9[%c0_34, %c20_35] : memref<16x224xf32, #tpu.memory_space<vmem>>, vector<16x200xf32>
    %c0_36 = arith.constant 0 : index
    %c21_37 = arith.constant 21 : index
    %30 = vector.load %arg9[%c0_36, %c21_37] : memref<16x224xf32, #tpu.memory_space<vmem>>, vector<16x200xf32>
    %c0_38 = arith.constant 0 : index
    %c22_39 = arith.constant 22 : index
    %31 = vector.load %arg9[%c0_38, %c22_39] : memref<16x224xf32, #tpu.memory_space<vmem>>, vector<16x200xf32>
    %32 = tpu.concatenate %23, %24, %25, %26, %27, %28, %29, %30, %31 in 0 : vector<16x200xf32>, vector<16x200xf32>, vector<16x200xf32>, vector<16x200xf32>, vector<16x200xf32>, vector<16x200xf32>, vector<16x200xf32>, vector<16x200xf32>, vector<16x200xf32> -> vector<144x200xf32>
    %c0_40 = arith.constant 0 : index
    %c0_41 = arith.constant 0 : index
    %33 = vector.load %arg3[%c0_40, %c0_41] : memref<16x144xf32, #tpu.memory_space<vmem>>, vector<16x144xf32>
    %cst_42 = arith.constant dense<0.000000e+00> : vector<16x200xf32>
    %34 = tpu.matmul %33, %32, %cst_42 {dimension_numbers = #tpu.dot_dimension_numbers<[1], [0], [0], [1], [0, 0, 1, 1], [], []>} : vector<16x144xf32>, vector<144x200xf32>, vector<16x200xf32> -> vector<16x200xf32>
    %c0_43 = arith.constant 0 : index
    %c0_44 = arith.constant 0 : index
    %35 = vector.load %arg4[%c0_43, %c0_44] : memref<16x1xf32, #tpu.memory_space<vmem>>, vector<16x1xf32>
    %36 = vector.broadcast %35 : vector<16x1xf32> to vector<16x200xf32>
    %37 = arith.addf %34, %36 : vector<16x200xf32>
    %cst_45 = arith.constant 0.000000e+00 : f32
    %38 = vector.broadcast %cst_45 : f32 to vector<16x200xf32>
    %39 = arith.maximumf %37, %38 : vector<16x200xf32>
    %40 = vector.broadcast %0 : vector<1x200xf32> to vector<16x200xf32>
    %41 = arith.mulf %39, %40 : vector<16x200xf32>
    %c0_46 = arith.constant 0 : index
    %c11_47 = arith.constant 11 : index
    %42 = vector.load %arg9[%c0_46, %c11_47] : memref<16x224xf32, #tpu.memory_space<vmem>>, vector<16x200xf32>
    tpu.vector_store %arg9[%c0_46, %c11_47], %41 {strides = array<i32>} : memref<16x224xf32, #tpu.memory_space<vmem>>, vector<16x200xf32>,
    %c0_48 = arith.constant 0 : index
    %c0_49 = arith.constant 0 : index
    %43 = vector.load %arg9[%c0_48, %c0_49] : memref<16x224xf32, #tpu.memory_space<vmem>>, vector<16x200xf32>
    %c0_50 = arith.constant 0 : index
    %c1_51 = arith.constant 1 : index
    %44 = vector.load %arg9[%c0_50, %c1_51] : memref<16x224xf32, #tpu.memory_space<vmem>>, vector<16x200xf32>
    %c0_52 = arith.constant 0 : index
    %c2_53 = arith.constant 2 : index
    %45 = vector.load %arg9[%c0_52, %c2_53] : memref<16x224xf32, #tpu.memory_space<vmem>>, vector<16x200xf32>
    %c0_54 = arith.constant 0 : index
    %c10_55 = arith.constant 10 : index
    %46 = vector.load %arg9[%c0_54, %c10_55] : memref<16x224xf32, #tpu.memory_space<vmem>>, vector<16x200xf32>
    %c0_56 = arith.constant 0 : index
    %c11_57 = arith.constant 11 : index
    %47 = vector.load %arg9[%c0_56, %c11_57] : memref<16x224xf32, #tpu.memory_space<vmem>>, vector<16x200xf32>
    %c0_58 = arith.constant 0 : index
    %c12_59 = arith.constant 12 : index
    %48 = vector.load %arg9[%c0_58, %c12_59] : memref<16x224xf32, #tpu.memory_space<vmem>>, vector<16x200xf32>
    %c0_60 = arith.constant 0 : index
    %c20_61 = arith.constant 20 : index
    %49 = vector.load %arg9[%c0_60, %c20_61] : memref<16x224xf32, #tpu.memory_space<vmem>>, vector<16x200xf32>
    %c0_62 = arith.constant 0 : index
    %c21_63 = arith.constant 21 : index
    %50 = vector.load %arg9[%c0_62, %c21_63] : memref<16x224xf32, #tpu.memory_space<vmem>>, vector<16x200xf32>
    %c0_64 = arith.constant 0 : index
    %c22_65 = arith.constant 22 : index
    %51 = vector.load %arg9[%c0_64, %c22_65] : memref<16x224xf32, #tpu.memory_space<vmem>>, vector<16x200xf32>
    %52 = tpu.concatenate %43, %44, %45, %46, %47, %48, %49, %50, %51 in 0 : vector<16x200xf32>, vector<16x200xf32>, vector<16x200xf32>, vector<16x200xf32>, vector<16x200xf32>, vector<16x200xf32>, vector<16x200xf32>, vector<16x200xf32>, vector<16x200xf32> -> vector<144x200xf32>
    %c0_66 = arith.constant 0 : index
    %c0_67 = arith.constant 0 : index
    %53 = vector.load %arg3[%c0_66, %c0_67] : memref<16x144xf32, #tpu.memory_space<vmem>>, vector<16x144xf32>
    %cst_68 = arith.constant dense<0.000000e+00> : vector<16x200xf32>
    %54 = tpu.matmul %53, %52, %cst_68 {dimension_numbers = #tpu.dot_dimension_numbers<[1], [0], [0], [1], [0, 0, 1, 1], [], []>} : vector<16x144xf32>, vector<144x200xf32>, vector<16x200xf32> -> vector<16x200xf32>
    %c0_69 = arith.constant 0 : index
    %c0_70 = arith.constant 0 : index
    %55 = vector.load %arg4[%c0_69, %c0_70] : memref<16x1xf32, #tpu.memory_space<vmem>>, vector<16x1xf32>
    %56 = vector.broadcast %55 : vector<16x1xf32> to vector<16x200xf32>
    %57 = arith.addf %54, %56 : vector<16x200xf32>
    %cst_71 = arith.constant 0.000000e+00 : f32
    %58 = vector.broadcast %cst_71 : f32 to vector<16x200xf32>
    %59 = arith.maximumf %57, %58 : vector<16x200xf32>
    %60 = vector.extract_strided_slice %59 {offsets = [0, 0], sizes = [16, 100], strides = [1, 1]} : vector<16x200xf32> to vector<16x100xf32>
    %61 = vector.shape_cast %60 : vector<16x100xf32> to vector<1x16x100xf32>
    %c0_72 = arith.constant 0 : index
    %c0_73 = arith.constant 0 : index
    %c0_74 = arith.constant 0 : index
    %62 = vector.load %arg5[%c0_72, %c0_73, %c0_74] : memref<10x16x100xf32, #tpu.memory_space<vmem>>, vector<10x16x100xf32>
    %63 = vector.broadcast %61 : vector<1x16x100xf32> to vector<10x16x100xf32>
    %64 = arith.mulf %63, %62 : vector<10x16x100xf32>
    %cst_75 = arith.constant dense<0.000000e+00> : vector<10x16xf32>
    %65 = vector.multi_reduction <add>, %64, %cst_75 [2] : vector<10x16x100xf32> to vector<10x16xf32>
    %cst_76 = arith.constant dense<0.000000e+00> : vector<10xf32>
    %66 = vector.multi_reduction <add>, %65, %cst_76 [1] : vector<10x16xf32> to vector<10xf32>
    %67 = vector.shape_cast %66 : vector<10xf32> to vector<1x10xf32>
    %68 = vector.extract_strided_slice %59 {offsets = [0, 100], sizes = [16, 100], strides = [1, 1]} : vector<16x200xf32> to vector<16x100xf32>
    %69 = vector.shape_cast %68 : vector<16x100xf32> to vector<1x16x100xf32>
    %c0_77 = arith.constant 0 : index
    %c0_78 = arith.constant 0 : index
    %c0_79 = arith.constant 0 : index
    %70 = vector.load %arg5[%c0_77, %c0_78, %c0_79] : memref<10x16x100xf32, #tpu.memory_space<vmem>>, vector<10x16x100xf32>
    %71 = vector.broadcast %69 : vector<1x16x100xf32> to vector<10x16x100xf32>
    %72 = arith.mulf %71, %70 : vector<10x16x100xf32>
    %cst_80 = arith.constant dense<0.000000e+00> : vector<10x16xf32>
    %73 = vector.multi_reduction <add>, %72, %cst_80 [2] : vector<10x16x100xf32> to vector<10x16xf32>
    %cst_81 = arith.constant dense<0.000000e+00> : vector<10xf32>
    %74 = vector.multi_reduction <add>, %73, %cst_81 [1] : vector<10x16xf32> to vector<10xf32>
    %75 = vector.shape_cast %74 : vector<10xf32> to vector<1x10xf32>
    %76 = tpu.concatenate %67, %75 in 0 : vector<1x10xf32>, vector<1x10xf32> -> vector<2x10xf32>
    %c0_82 = arith.constant 0 : index
    %c0_83 = arith.constant 0 : index
    %77 = vector.load %arg6[%c0_82, %c0_83] : memref<1x10xf32, #tpu.memory_space<vmem>>, vector<1x10xf32>
    %78 = vector.broadcast %77 : vector<1x10xf32> to vector<2x10xf32>
    %79 = arith.addf %76, %78 : vector<2x10xf32>
    %c0_84 = arith.constant 0 : index
    %c0_85 = arith.constant 0 : index
    %80 = vector.load %arg8[%c0_84, %c0_85] : memref<2x10xf32, #tpu.memory_space<vmem>>, vector<2x10xf32>
    tpu.vector_store %arg8[%c0_84, %c0_85], %79 {strides = array<i32>} : memref<2x10xf32, #tpu.memory_space<vmem>>, vector<2x10xf32>,
    return
  }
}

</mosaic_0001>

<llo_original>
// kernel: test_model_forward.1
$region0: #{test_model_forward.1}
  #allocation0 [shape = 'u32[]', space=smem, size = 0x4, offset = 0x4, fixed_abs, tag = 'smem constant byte address 0x4 - core index']
  #allocation1 [shape = 'u32[72,128]{1,0:T(1,128)}', space=vmem, size = 0x9000, scoped, tag = 'internal scratch']
  #allocation2 [shape = 'f32[16,224]{1,0:T(8,128)}', space=vmem, size = 0x4000, scoped, tag = 'scratch operand']
  %s0 = inlined_call_operand.vmem [shape: f32[16,224], index: 0, kind: input, shape index: {}]
  %s1 = inlined_call_operand.vmem [shape: f32[16,144], index: 1, kind: input, shape index: {}]
  %s2 = inlined_call_operand.vmem [shape: f32[16,1], index: 2, kind: input, shape index: {}]
  %s3 = inlined_call_operand.vmem [shape: f32[16,144], index: 3, kind: input, shape index: {}]
  %s4 = inlined_call_operand.vmem [shape: f32[16,1], index: 4, kind: input, shape index: {}]
  %s5 = inlined_call_operand.vmem [shape: f32[10,16,100], index: 5, kind: input, shape index: {}]
  %s6 = inlined_call_operand.vmem [shape: f32[1,10], index: 6, kind: input, shape index: {}]
  %s7 = inlined_call_operand.vmem [shape: f32[1,200], index: 7, kind: input, shape index: {}]
  %s8 = inlined_call_operand.hbm [shape: f32[2,10], index: 8, kind: output, shape index: {}]
  %s9 = sld [smem:[#allocation0]]
  $region42: #{test_model_forward.1} parent=0
    _
  %s11 = ssub.s32 1, %s9
  %s12 = scalar_select 0, %s11, %s9
  $region1: #{test_model_forward.1} parent=0
    #allocation3 [shape = 'u8[1024]{0}', space=vmem, size = 0x400, scoped, tag = 'output window, operand 0, single buffered']
    #allocation4 [shape = 's32[1]{0}', space=sflag, size = 0x4, scoped, tag = 'scoped memory for test_model_forward.1']
    %13 = vsyncpa [#allocation4], 0
    // Predicated region
    $region2: #{test_model_forward.1} parent=1 // pred_check
      _
    $region3: #{test_model_forward.1} parent=1 // pred_check_branch
      %15 = sbr.rel (0) target = $region5
    $region4: #{test_model_forward.1} parent=1 // pred_region
      _
    $region5: #{test_model_forward.1} parent=1 // pred_fallthru
      _
    // Predicated region
    $region6: #{test_model_forward.1} parent=1 // pred_check
      _
    $region7: #{test_model_forward.1} parent=1 // pred_check_branch
      %17 = sbr.rel (0) target = $region9
    $region8: #{test_model_forward.1} parent=1 // pred_region
      _
    $region9: #{test_model_forward.1} parent=1 // pred_fallthru
      _
    // Predicated region
    $region10: #{test_model_forward.1} parent=1 // pred_check
      _
    $region11: #{test_model_forward.1} parent=1 // pred_check_branch
      %19 = sbr.rel (0) target = $region13
    $region12: #{test_model_forward.1} parent=1 // pred_region
      _
    $region13: #{test_model_forward.1} parent=1 // pred_fallthru
      _
    // Predicated region
    $region14: #{test_model_forward.1} parent=1 // pred_check
      _
    $region15: #{test_model_forward.1} parent=1 // pred_check_branch
      %21 = sbr.rel (0) target = $region17
    $region16: #{test_model_forward.1} parent=1 // pred_region
      _
    $region17: #{test_model_forward.1} parent=1 // pred_fallthru
      _
    // Predicated region
    $region18: #{test_model_forward.1} parent=1 // pred_check
      _
    $region19: #{test_model_forward.1} parent=1 // pred_check_branch
      %23 = sbr.rel (0) target = $region21
    $region20: #{test_model_forward.1} parent=1 // pred_region
      _
    $region21: #{test_model_forward.1} parent=1 // pred_fallthru
      _
    // Predicated region
    $region22: #{test_model_forward.1} parent=1 // pred_check
      _
    $region23: #{test_model_forward.1} parent=1 // pred_check_branch
      %25 = sbr.rel (0) target = $region25
    $region24: #{test_model_forward.1} parent=1 // pred_region
      _
    $region25: #{test_model_forward.1} parent=1 // pred_fallthru
      _
    // Predicated region
    $region26: #{test_model_forward.1} parent=1 // pred_check
      _
    $region27: #{test_model_forward.1} parent=1 // pred_check_branch
      %27 = sbr.rel (0) target = $region29
    $region28: #{test_model_forward.1} parent=1 // pred_region
      _
    $region29: #{test_model_forward.1} parent=1 // pred_fallthru
      _
    // Predicated region
    $region30: #{test_model_forward.1} parent=1 // pred_check
      _
    $region31: #{test_model_forward.1} parent=1 // pred_check_branch
      %29 = sbr.rel (0) target = $region33
    $region32: #{test_model_forward.1} parent=1 // pred_region
      _
    $region33: #{test_model_forward.1} parent=1 // pred_fallthru
      _
    %v30 = vld [vmem:[%s7] sm:$0x3]
    %v31 = vld [vmem:[%s0] sm:$0xff]
    %v32 = vld [vmem:[%s0 + $0x8] sm:$0xff]
    %v33 = vld [vmem:[%s0 + $0x10] sm:$0xff]
    %v34 = vld [vmem:[%s0 + $0x18] sm:$0xff]
    %35 = vst [vmem:[#allocation2] sm:$0xff] %v31
    %vm36 = vcmask 785408
    %37 = vst.msk [vmem:[#allocation2 + $0x8] sm:$0xff] %vm36, %v32
    %38 = vst [vmem:[#allocation2 + $0x10] sm:$0xff] %v33
    %39 = vst.msk [vmem:[#allocation2 + $0x18] sm:$0xff] %vm36, %v34
    %v40 = vld [vmem:[#allocation2] sm:$0xff]
    %v41 = vld [vmem:[#allocation2 + $0x8] sm:$0xff]
    %v42 = vld [vmem:[#allocation2 + $0x10] sm:$0xff]
    %v43 = vld [vmem:[#allocation2 + $0x18] sm:$0xff]
    %48 = vrot.lane.b32.xlu0 %v40, 127
    %v49 = vpop.permute.xlu0 %48
    %50 = vrot.lane.b32.xlu0 %v41, 127
    %v51 = vpop.permute.xlu0 %50
    %52 = vrot.lane.b32.xlu0 %v42, 127
    %v53 = vpop.permute.xlu0 %52
    %54 = vrot.lane.b32.xlu0 %v43, 127
    %v55 = vpop.permute.xlu0 %54
    %vm56 = vcmask 1039360
    %v57 = vsel %vm56, %v49, %v51
    %v58 = vsel %vm56, %v53, %v55
    %63 = vrot.lane.b32.xlu0 %v40, 126
    %v64 = vpop.permute.xlu0 %63
    %65 = vrot.lane.b32.xlu0 %v41, 126
    %v66 = vpop.permute.xlu0 %65
    %67 = vrot.lane.b32.xlu0 %v42, 126
    %v68 = vpop.permute.xlu0 %67
    %69 = vrot.lane.b32.xlu0 %v43, 126
    %v70 = vpop.permute.xlu0 %69
    %vm71 = vcmask 1031168
    %v72 = vsel %vm71, %v64, %v66
    %v73 = vsel %vm71, %v68, %v70
    %78 = vrot.lane.b32.xlu0 %v40, 118
    %v79 = vpop.permute.xlu0 %78
    %80 = vrot.lane.b32.xlu0 %v41, 118
    %v81 = vpop.permute.xlu0 %80
    %82 = vrot.lane.b32.xlu0 %v42, 118
    %v83 = vpop.permute.xlu0 %82
    %84 = vrot.lane.b32.xlu0 %v43, 118
    %v85 = vpop.permute.xlu0 %84
    %vm86 = vcmask 965632
    %v87 = vsel %vm86, %v79, %v81
    %v88 = vsel %vm86, %v83, %v85
    %93 = vrot.lane.b32.xlu0 %v40, 117
    %v94 = vpop.permute.xlu0 %93
    %95 = vrot.lane.b32.xlu0 %v41, 117
    %v96 = vpop.permute.xlu0 %95
    %97 = vrot.lane.b32.xlu0 %v42, 117
    %v98 = vpop.permute.xlu0 %97
    %99 = vrot.lane.b32.xlu0 %v43, 117
    %v100 = vpop.permute.xlu0 %99
    %vm101 = vcmask 957440
    %v102 = vsel %vm101, %v94, %v96
    %v103 = vsel %vm101, %v98, %v100
    %108 = vrot.lane.b32.xlu0 %v40, 116
    %v109 = vpop.permute.xlu0 %108
    %110 = vrot.lane.b32.xlu0 %v41, 116
    %v111 = vpop.permute.xlu0 %110
    %112 = vrot.lane.b32.xlu0 %v42, 116
    %v113 = vpop.permute.xlu0 %112
    %114 = vrot.lane.b32.xlu0 %v43, 116
    %v115 = vpop.permute.xlu0 %114
    %vm116 = vcmask 949248
    %v117 = vsel %vm116, %v109, %v111
    %v118 = vsel %vm116, %v113, %v115
    %123 = vrot.lane.b32.xlu0 %v40, 108
    %v124 = vpop.permute.xlu0 %123
    %125 = vrot.lane.b32.xlu0 %v41, 108
    %v126 = vpop.permute.xlu0 %125
    %127 = vrot.lane.b32.xlu0 %v42, 108
    %v128 = vpop.permute.xlu0 %127
    %129 = vrot.lane.b32.xlu0 %v43, 108
    %v130 = vpop.permute.xlu0 %129
    %vm131 = vcmask 883712
    %v132 = vsel %vm131, %v124, %v126
    %v133 = vsel %vm131, %v128, %v130
    %138 = vrot.lane.b32.xlu0 %v40, 107
    %v139 = vpop.permute.xlu0 %138
    %140 = vrot.lane.b32.xlu0 %v41, 107
    %v141 = vpop.permute.xlu0 %140
    %142 = vrot.lane.b32.xlu0 %v42, 107
    %v143 = vpop.permute.xlu0 %142
    %144 = vrot.lane.b32.xlu0 %v43, 107
    %v145 = vpop.permute.xlu0 %144
    %vm146 = vcmask 875520
    %v147 = vsel %vm146, %v139, %v141
    %v148 = vsel %vm146, %v143, %v145
    %153 = vrot.lane.b32.xlu0 %v40, 106
    %v154 = vpop.permute.xlu0 %153
    %155 = vrot.lane.b32.xlu0 %v41, 106
    %v156 = vpop.permute.xlu0 %155
    %157 = vrot.lane.b32.xlu0 %v42, 106
    %v158 = vpop.permute.xlu0 %157
    %159 = vrot.lane.b32.xlu0 %v43, 106
    %v160 = vpop.permute.xlu0 %159
    %vm161 = vcmask 867328
    %v162 = vsel %vm161, %v154, %v156
    %v163 = vsel %vm161, %v158, %v160
    %v168 = vld [vmem:[%s1] sm:$0xff]
    %v169 = vld [vmem:[%s1 + $0x8] sm:$0xff]
    %v170 = vld [vmem:[%s1 + $0x10] sm:$0xff]
    %v171 = vld [vmem:[%s1 + $0x18] sm:$0xff]
    %v172 = vld [vmem:[%s2] sm:$0xff]
    %v173 = vld [vmem:[%s2 + $0x8] sm:$0xff]
    %175 = vset.pattern.permute.xlu0 0
    %176 = vperm.xlu0 %175, %v172
    %v177 = vpop.permute.xlu0 %176
    %180 = vset.pattern.permute.xlu0 0
    %181 = vperm.xlu0 %180, %v173
    %v182 = vpop.permute.xlu0 %181
    %vm184 = vcmask 130048
    %v186 = vsel %vm184, %v169, 0
    %v189 = vsel %vm184, %v171, 0
    %191 = vmatpush.msra.mxu0 %v148
    %192 = vmatpush.msra.mxu0 %v147
    %193 = vmatpush.msra.mxu0 %v133
    %194 = vmatpush.msra.mxu0 %v132
    %195 = vmatpush.msra.mxu0 %v118
    %196 = vmatpush.msra.mxu0 %v117
    %197 = vmatpush.msra.mxu0 %v103
    %198 = vmatpush.msra.mxu0 %v102
    %199 = vmatpush.msra.mxu0 %v88
    %200 = vmatpush.msra.mxu0 %v87
    %201 = vmatpush.msra.mxu0 %v73
    %202 = vmatpush.msra.mxu0 %v72
    %203 = vmatpush.msra.mxu0 %v58
    %204 = vmatpush.msra.mxu0 %v57
    %205 = vmatpush.msra.mxu0 %v42
    %206 = vmatpush.msra.mxu0 %v40
    %207 = vmatmul.f32.gmra.mxu0 %v168
    %v208 = vpop.f32.mrf.mxu0
    %v209 = vadd.f32 %v177, %v208
    %210 = vmatmul.f32.gmra.mxu0 %v170
    %v211 = vpop.f32.mrf.mxu0
    %v212 = vadd.f32 %v182, %v211
    %213 = vdwg.mxu0
    %214 = vmatpush.msra.mxu0 0.0
    %215 = vmatpush.msra.mxu0 0.0
    %216 = vmatpush.msra.mxu0 0.0
    %217 = vmatpush.msra.mxu0 0.0
    %218 = vmatpush.msra.mxu0 0.0
    %219 = vmatpush.msra.mxu0 0.0
    %220 = vmatpush.msra.mxu0 0.0
    %221 = vmatpush.msra.mxu0 0.0
    %222 = vmatpush.msra.mxu0 0.0
    %223 = vmatpush.msra.mxu0 0.0
    %224 = vmatpush.msra.mxu0 0.0
    %225 = vmatpush.msra.mxu0 0.0
    %226 = vmatpush.msra.mxu0 0.0
    %227 = vmatpush.msra.mxu0 0.0
    %228 = vmatpush.msra.mxu0 %v163
    %229 = vmatpush.msra.mxu0 %v162
    %230 = vmatmul.f32.gmra.mxu0 %v186
    %v231 = vpop.f32.mrf.mxu0
    %v232 = vadd.f32 %v209, %v231
    %233 = vmatmul.f32.gmra.mxu0 %v189
    %v234 = vpop.f32.mrf.mxu0
    %v235 = vadd.f32 %v212, %v234
    %236 = vdwg.mxu0
    %237 = vmatpush.msra.mxu0 %v145
    %238 = vmatpush.msra.mxu0 %v141
    %239 = vmatpush.msra.mxu0 %v130
    %240 = vmatpush.msra.mxu0 %v126
    %241 = vmatpush.msra.mxu0 %v115
    %242 = vmatpush.msra.mxu0 %v111
    %243 = vmatpush.msra.mxu0 %v100
    %244 = vmatpush.msra.mxu0 %v96
    %245 = vmatpush.msra.mxu0 %v85
    %246 = vmatpush.msra.mxu0 %v81
    %247 = vmatpush.msra.mxu0 %v70
    %248 = vmatpush.msra.mxu0 %v66
    %249 = vmatpush.msra.mxu0 %v55
    %250 = vmatpush.msra.mxu0 %v51
    %251 = vmatpush.msra.mxu0 %v43
    %252 = vmatpush.msra.mxu0 %v41
    %253 = vmatmul.f32.gmra.mxu0 %v168
    %v254 = vpop.f32.mrf.mxu0
    %v255 = vadd.f32 %v177, %v254
    %256 = vmatmul.f32.gmra.mxu0 %v170
    %v257 = vpop.f32.mrf.mxu0
    %v258 = vadd.f32 %v182, %v257
    %259 = vdwg.mxu0
    %260 = vmatpush.msra.mxu0 0.0
    %261 = vmatpush.msra.mxu0 0.0
    %262 = vmatpush.msra.mxu0 0.0
    %263 = vmatpush.msra.mxu0 0.0
    %264 = vmatpush.msra.mxu0 0.0
    %265 = vmatpush.msra.mxu0 0.0
    %266 = vmatpush.msra.mxu0 0.0
    %267 = vmatpush.msra.mxu0 0.0
    %268 = vmatpush.msra.mxu0 0.0
    %269 = vmatpush.msra.mxu0 0.0
    %270 = vmatpush.msra.mxu0 0.0
    %271 = vmatpush.msra.mxu0 0.0
    %272 = vmatpush.msra.mxu0 0.0
    %273 = vmatpush.msra.mxu0 0.0
    %274 = vmatpush.msra.mxu0 %v160
    %275 = vmatpush.msra.mxu0 %v156
    %276 = vmatmul.f32.gmra.mxu0 %v186
    %v277 = vpop.f32.mrf.mxu0
    %v278 = vadd.f32 %v255, %v277
    %279 = vmatmul.f32.gmra.mxu0 %v189
    %v280 = vpop.f32.mrf.mxu0
    %v281 = vadd.f32 %v258, %v280
    %282 = vdwg.mxu0
    %v283 = vmax.f32 %v232, 0.0
    %v284 = vmax.f32 %v278, 0.0
    %v285 = vmax.f32 %v235, 0.0
    %v286 = vmax.f32 %v281, 0.0
    %v288 = vperm.slane %v30, 0
    %v289 = vperm.slane %v30, 1
    %v292 = vmul.f32 %v283, %v288
    %v293 = vmul.f32 %v284, %v289
    %v294 = vmul.f32 %v285, %v288
    %v295 = vmul.f32 %v286, %v289
    %300 = vrot.lane.b32.xlu0 %v292, 11
    %v301 = vpop.permute.xlu0 %300
    %302 = vrot.lane.b32.xlu0 %v293, 11
    %v303 = vpop.permute.xlu0 %302
    %304 = vrot.lane.b32.xlu0 %v294, 11
    %v305 = vpop.permute.xlu0 %304
    %306 = vrot.lane.b32.xlu0 %v295, 11
    %v307 = vpop.permute.xlu0 %306
    %vm308 = vcmask 89088
    %v309 = vsel %vm308, %v301, %v303
    %v310 = vsel %vm308, %v305, %v307
    %vm315 = vcmask 1047640
    %316 = vst.msk [vmem:[#allocation2] sm:$0xff] %vm315, %v301
    %vm317 = vcmask 678912
    %318 = vst.msk [vmem:[#allocation2 + $0x8] sm:$0xff] %vm317, %v309
    %319 = vst.msk [vmem:[#allocation2 + $0x10] sm:$0xff] %vm315, %v305
    %320 = vst.msk [vmem:[#allocation2 + $0x18] sm:$0xff] %vm317, %v310
    %v321 = vld [vmem:[#allocation2] sm:$0xff]
    %v322 = vld [vmem:[#allocation2 + $0x8] sm:$0xff]
    %v323 = vld [vmem:[#allocation2 + $0x10] sm:$0xff]
    %v324 = vld [vmem:[#allocation2 + $0x18] sm:$0xff]
    %329 = vrot.lane.b32.xlu0 %v321, 127
    %v330 = vpop.permute.xlu0 %329
    %331 = vrot.lane.b32.xlu0 %v322, 127
    %v332 = vpop.permute.xlu0 %331
    %333 = vrot.lane.b32.xlu0 %v323, 127
    %v334 = vpop.permute.xlu0 %333
    %335 = vrot.lane.b32.xlu0 %v324, 127
    %v336 = vpop.permute.xlu0 %335
    %v337 = vsel %vm56, %v330, %v332
    %v338 = vsel %vm56, %v334, %v336
    %343 = vrot.lane.b32.xlu0 %v321, 126
    %v344 = vpop.permute.xlu0 %343
    %345 = vrot.lane.b32.xlu0 %v322, 126
    %v346 = vpop.permute.xlu0 %345
    %347 = vrot.lane.b32.xlu0 %v323, 126
    %v348 = vpop.permute.xlu0 %347
    %349 = vrot.lane.b32.xlu0 %v324, 126
    %v350 = vpop.permute.xlu0 %349
    %v351 = vsel %vm71, %v344, %v346
    %v352 = vsel %vm71, %v348, %v350
    %357 = vrot.lane.b32.xlu0 %v321, 118
    %v358 = vpop.permute.xlu0 %357
    %359 = vrot.lane.b32.xlu0 %v322, 118
    %v360 = vpop.permute.xlu0 %359
    %361 = vrot.lane.b32.xlu0 %v323, 118
    %v362 = vpop.permute.xlu0 %361
    %363 = vrot.lane.b32.xlu0 %v324, 118
    %v364 = vpop.permute.xlu0 %363
    %v365 = vsel %vm86, %v358, %v360
    %v366 = vsel %vm86, %v362, %v364
    %371 = vrot.lane.b32.xlu0 %v321, 117
    %v372 = vpop.permute.xlu0 %371
    %373 = vrot.lane.b32.xlu0 %v322, 117
    %v374 = vpop.permute.xlu0 %373
    %375 = vrot.lane.b32.xlu0 %v323, 117
    %v376 = vpop.permute.xlu0 %375
    %377 = vrot.lane.b32.xlu0 %v324, 117
    %v378 = vpop.permute.xlu0 %377
    %v379 = vsel %vm101, %v372, %v374
    %v380 = vsel %vm101, %v376, %v378
    %385 = vrot.lane.b32.xlu0 %v321, 116
    %v386 = vpop.permute.xlu0 %385
    %387 = vrot.lane.b32.xlu0 %v322, 116
    %v388 = vpop.permute.xlu0 %387
    %389 = vrot.lane.b32.xlu0 %v323, 116
    %v390 = vpop.permute.xlu0 %389
    %391 = vrot.lane.b32.xlu0 %v324, 116
    %v392 = vpop.permute.xlu0 %391
    %v393 = vsel %vm116, %v386, %v388
    %v394 = vsel %vm116, %v390, %v392
    %399 = vrot.lane.b32.xlu0 %v321, 108
    %v400 = vpop.permute.xlu0 %399
    %401 = vrot.lane.b32.xlu0 %v322, 108
    %v402 = vpop.permute.xlu0 %401
    %403 = vrot.lane.b32.xlu0 %v323, 108
    %v404 = vpop.permute.xlu0 %403
    %405 = vrot.lane.b32.xlu0 %v324, 108
    %v406 = vpop.permute.xlu0 %405
    %v407 = vsel %vm131, %v400, %v402
    %v408 = vsel %vm131, %v404, %v406
    %413 = vrot.lane.b32.xlu0 %v321, 107
    %v414 = vpop.permute.xlu0 %413
    %415 = vrot.lane.b32.xlu0 %v322, 107
    %v416 = vpop.permute.xlu0 %415
    %417 = vrot.lane.b32.xlu0 %v323, 107
    %v418 = vpop.permute.xlu0 %417
    %419 = vrot.lane.b32.xlu0 %v324, 107
    %v420 = vpop.permute.xlu0 %419
    %v421 = vsel %vm146, %v414, %v416
    %v422 = vsel %vm146, %v418, %v420
    %427 = vrot.lane.b32.xlu0 %v321, 106
    %v428 = vpop.permute.xlu0 %427
    %429 = vrot.lane.b32.xlu0 %v322, 106
    %v430 = vpop.permute.xlu0 %429
    %431 = vrot.lane.b32.xlu0 %v323, 106
    %v432 = vpop.permute.xlu0 %431
    %433 = vrot.lane.b32.xlu0 %v324, 106
    %v434 = vpop.permute.xlu0 %433
    %v435 = vsel %vm161, %v428, %v430
    %v436 = vsel %vm161, %v432, %v434
    %v441 = vld [vmem:[%s3] sm:$0xff]
    %v442 = vld [vmem:[%s3 + $0x8] sm:$0xff]
    %v443 = vld [vmem:[%s3 + $0x10] sm:$0xff]
    %v444 = vld [vmem:[%s3 + $0x18] sm:$0xff]
    %v445 = vld [vmem:[%s4] sm:$0xff]
    %v446 = vld [vmem:[%s4 + $0x8] sm:$0xff]
    %448 = vset.pattern.permute.xlu0 0
    %449 = vperm.xlu0 %448, %v445
    %v450 = vpop.permute.xlu0 %449
    %453 = vset.pattern.permute.xlu0 0
    %454 = vperm.xlu0 %453, %v446
    %v455 = vpop.permute.xlu0 %454
    %v458 = vsel %vm184, %v442, 0
    %v461 = vsel %vm184, %v444, 0
    %463 = vmatpush.msra.mxu0 %v422
    %464 = vmatpush.msra.mxu0 %v421
    %465 = vmatpush.msra.mxu0 %v408
    %466 = vmatpush.msra.mxu0 %v407
    %467 = vmatpush.msra.mxu0 %v394
    %468 = vmatpush.msra.mxu0 %v393
    %469 = vmatpush.msra.mxu0 %v380
    %470 = vmatpush.msra.mxu0 %v379
    %471 = vmatpush.msra.mxu0 %v366
    %472 = vmatpush.msra.mxu0 %v365
    %473 = vmatpush.msra.mxu0 %v352
    %474 = vmatpush.msra.mxu0 %v351
    %475 = vmatpush.msra.mxu0 %v338
    %476 = vmatpush.msra.mxu0 %v337
    %477 = vmatpush.msra.mxu0 %v323
    %478 = vmatpush.msra.mxu0 %v321
    %479 = vmatmul.f32.gmra.mxu0 %v441
    %v480 = vpop.f32.mrf.mxu0
    %v481 = vadd.f32 %v450, %v480
    %482 = vmatmul.f32.gmra.mxu0 %v443
    %v483 = vpop.f32.mrf.mxu0
    %v484 = vadd.f32 %v455, %v483
    %485 = vdwg.mxu0
    %486 = vmatpush.msra.mxu0 0.0
    %487 = vmatpush.msra.mxu0 0.0
    %488 = vmatpush.msra.mxu0 0.0
    %489 = vmatpush.msra.mxu0 0.0
    %490 = vmatpush.msra.mxu0 0.0
    %491 = vmatpush.msra.mxu0 0.0
    %492 = vmatpush.msra.mxu0 0.0
    %493 = vmatpush.msra.mxu0 0.0
    %494 = vmatpush.msra.mxu0 0.0
    %495 = vmatpush.msra.mxu0 0.0
    %496 = vmatpush.msra.mxu0 0.0
    %497 = vmatpush.msra.mxu0 0.0
    %498 = vmatpush.msra.mxu0 0.0
    %499 = vmatpush.msra.mxu0 0.0
    %500 = vmatpush.msra.mxu0 %v436
    %501 = vmatpush.msra.mxu0 %v435
    %502 = vmatmul.f32.gmra.mxu0 %v458
    %v503 = vpop.f32.mrf.mxu0
    %v504 = vadd.f32 %v481, %v503
    %505 = vmatmul.f32.gmra.mxu0 %v461
    %v506 = vpop.f32.mrf.mxu0
    %v507 = vadd.f32 %v484, %v506
    %508 = vdwg.mxu0
    %509 = vmatpush.msra.mxu0 %v420
    %510 = vmatpush.msra.mxu0 %v416
    %511 = vmatpush.msra.mxu0 %v406
    %512 = vmatpush.msra.mxu0 %v402
    %513 = vmatpush.msra.mxu0 %v392
    %514 = vmatpush.msra.mxu0 %v388
    %515 = vmatpush.msra.mxu0 %v378
    %516 = vmatpush.msra.mxu0 %v374
    %517 = vmatpush.msra.mxu0 %v364
    %518 = vmatpush.msra.mxu0 %v360
    %519 = vmatpush.msra.mxu0 %v350
    %520 = vmatpush.msra.mxu0 %v346
    %521 = vmatpush.msra.mxu0 %v336
    %522 = vmatpush.msra.mxu0 %v332
    %523 = vmatpush.msra.mxu0 %v324
    %524 = vmatpush.msra.mxu0 %v322
    %525 = vmatmul.f32.gmra.mxu0 %v441
    %v526 = vpop.f32.mrf.mxu0
    %v527 = vadd.f32 %v450, %v526
    %528 = vmatmul.f32.gmra.mxu0 %v443
    %v529 = vpop.f32.mrf.mxu0
    %v530 = vadd.f32 %v455, %v529
    %531 = vdwg.mxu0
    %532 = vmatpush.msra.mxu0 0.0
    %533 = vmatpush.msra.mxu0 0.0
    %534 = vmatpush.msra.mxu0 0.0
    %535 = vmatpush.msra.mxu0 0.0
    %536 = vmatpush.msra.mxu0 0.0
    %537 = vmatpush.msra.mxu0 0.0
    %538 = vmatpush.msra.mxu0 0.0
    %539 = vmatpush.msra.mxu0 0.0
    %540 = vmatpush.msra.mxu0 0.0
    %541 = vmatpush.msra.mxu0 0.0
    %542 = vmatpush.msra.mxu0 0.0
    %543 = vmatpush.msra.mxu0 0.0
    %544 = vmatpush.msra.mxu0 0.0
    %545 = vmatpush.msra.mxu0 0.0
    %546 = vmatpush.msra.mxu0 %v434
    %547 = vmatpush.msra.mxu0 %v430
    %548 = vmatmul.f32.gmra.mxu0 %v458
    %v549 = vpop.f32.mrf.mxu0
    %v550 = vadd.f32 %v527, %v549
    %551 = vmatmul.f32.gmra.mxu0 %v461
    %v552 = vpop.f32.mrf.mxu0
    %v553 = vadd.f32 %v530, %v552
    %554 = vdwg.mxu0
    %v555 = vmax.f32 %v504, 0.0
    %v556 = vmax.f32 %v550, 0.0
    %v557 = vmax.f32 %v507, 0.0
    %v558 = vmax.f32 %v553, 0.0
    %v559 = vmul.f32 %v555, %v288
    %v560 = vmul.f32 %v556, %v289
    %v561 = vmul.f32 %v557, %v288
    %v562 = vmul.f32 %v558, %v289
    %567 = vrot.lane.b32.xlu0 %v559, 11
    %v568 = vpop.permute.xlu0 %567
    %569 = vrot.lane.b32.xlu0 %v560, 11
    %v570 = vpop.permute.xlu0 %569
    %571 = vrot.lane.b32.xlu0 %v561, 11
    %v572 = vpop.permute.xlu0 %571
    %573 = vrot.lane.b32.xlu0 %v562, 11
    %v574 = vpop.permute.xlu0 %573
    %v575 = vsel %vm308, %v568, %v570
    %v576 = vsel %vm308, %v572, %v574
    %581 = vst.msk [vmem:[#allocation2] sm:$0xff] %vm315, %v568
    %582 = vst.msk [vmem:[#allocation2 + $0x8] sm:$0xff] %vm317, %v575
    %583 = vst.msk [vmem:[#allocation2 + $0x10] sm:$0xff] %vm315, %v572
    %584 = vst.msk [vmem:[#allocation2 + $0x18] sm:$0xff] %vm317, %v576
    %v585 = vld [vmem:[#allocation2] sm:$0xff]
    %v586 = vld [vmem:[#allocation2 + $0x8] sm:$0xff]
    %v587 = vld [vmem:[#allocation2 + $0x10] sm:$0xff]
    %v588 = vld [vmem:[#allocation2 + $0x18] sm:$0xff]
    %593 = vrot.lane.b32.xlu0 %v585, 127
    %v594 = vpop.permute.xlu0 %593
    %595 = vrot.lane.b32.xlu0 %v586, 127
    %v596 = vpop.permute.xlu0 %595
    %597 = vrot.lane.b32.xlu0 %v587, 127
    %v598 = vpop.permute.xlu0 %597
    %599 = vrot.lane.b32.xlu0 %v588, 127
    %v600 = vpop.permute.xlu0 %599
    %v601 = vsel %vm56, %v594, %v596
    %v602 = vsel %vm56, %v598, %v600
    %607 = vrot.lane.b32.xlu0 %v585, 126
    %v608 = vpop.permute.xlu0 %607
    %609 = vrot.lane.b32.xlu0 %v586, 126
    %v610 = vpop.permute.xlu0 %609
    %611 = vrot.lane.b32.xlu0 %v587, 126
    %v612 = vpop.permute.xlu0 %611
    %613 = vrot.lane.b32.xlu0 %v588, 126
    %v614 = vpop.permute.xlu0 %613
    %v615 = vsel %vm71, %v608, %v610
    %v616 = vsel %vm71, %v612, %v614
    %621 = vrot.lane.b32.xlu0 %v585, 118
    %v622 = vpop.permute.xlu0 %621
    %623 = vrot.lane.b32.xlu0 %v586, 118
    %v624 = vpop.permute.xlu0 %623
    %625 = vrot.lane.b32.xlu0 %v587, 118
    %v626 = vpop.permute.xlu0 %625
    %627 = vrot.lane.b32.xlu0 %v588, 118
    %v628 = vpop.permute.xlu0 %627
    %v629 = vsel %vm86, %v622, %v624
    %v630 = vsel %vm86, %v626, %v628
    %635 = vrot.lane.b32.xlu0 %v585, 117
    %v636 = vpop.permute.xlu0 %635
    %637 = vrot.lane.b32.xlu0 %v586, 117
    %v638 = vpop.permute.xlu0 %637
    %639 = vrot.lane.b32.xlu0 %v587, 117
    %v640 = vpop.permute.xlu0 %639
    %641 = vrot.lane.b32.xlu0 %v588, 117
    %v642 = vpop.permute.xlu0 %641
    %v643 = vsel %vm101, %v636, %v638
    %v644 = vsel %vm101, %v640, %v642
    %649 = vrot.lane.b32.xlu0 %v585, 116
    %v650 = vpop.permute.xlu0 %649
    %651 = vrot.lane.b32.xlu0 %v586, 116
    %v652 = vpop.permute.xlu0 %651
    %653 = vrot.lane.b32.xlu0 %v587, 116
    %v654 = vpop.permute.xlu0 %653
    %655 = vrot.lane.b32.xlu0 %v588, 116
    %v656 = vpop.permute.xlu0 %655
    %v657 = vsel %vm116, %v650, %v652
    %v658 = vsel %vm116, %v654, %v656
    %663 = vrot.lane.b32.xlu0 %v585, 108
    %v664 = vpop.permute.xlu0 %663
    %665 = vrot.lane.b32.xlu0 %v586, 108
    %v666 = vpop.permute.xlu0 %665
    %667 = vrot.lane.b32.xlu0 %v587, 108
    %v668 = vpop.permute.xlu0 %667
    %669 = vrot.lane.b32.xlu0 %v588, 108
    %v670 = vpop.permute.xlu0 %669
    %v671 = vsel %vm131, %v664, %v666
    %v672 = vsel %vm131, %v668, %v670
    %677 = vrot.lane.b32.xlu0 %v585, 107
    %v678 = vpop.permute.xlu0 %677
    %679 = vrot.lane.b32.xlu0 %v586, 107
    %v680 = vpop.permute.xlu0 %679
    %681 = vrot.lane.b32.xlu0 %v587, 107
    %v682 = vpop.permute.xlu0 %681
    %683 = vrot.lane.b32.xlu0 %v588, 107
    %v684 = vpop.permute.xlu0 %683
    %v685 = vsel %vm146, %v678, %v680
    %v686 = vsel %vm146, %v682, %v684
    %691 = vrot.lane.b32.xlu0 %v585, 106
    %v692 = vpop.permute.xlu0 %691
    %693 = vrot.lane.b32.xlu0 %v586, 106
    %v694 = vpop.permute.xlu0 %693
    %695 = vrot.lane.b32.xlu0 %v587, 106
    %v696 = vpop.permute.xlu0 %695
    %697 = vrot.lane.b32.xlu0 %v588, 106
    %v698 = vpop.permute.xlu0 %697
    %v699 = vsel %vm161, %v692, %v694
    %v700 = vsel %vm161, %v696, %v698
    %v705 = vld [vmem:[%s3] sm:$0xff]
    %v706 = vld [vmem:[%s3 + $0x8] sm:$0xff]
    %v707 = vld [vmem:[%s3 + $0x10] sm:$0xff]
    %v708 = vld [vmem:[%s3 + $0x18] sm:$0xff]
    %v709 = vld [vmem:[%s4] sm:$0xff]
    %v710 = vld [vmem:[%s4 + $0x8] sm:$0xff]
    %712 = vset.pattern.permute.xlu0 0
    %713 = vperm.xlu0 %712, %v709
    %v714 = vpop.permute.xlu0 %713
    %717 = vset.pattern.permute.xlu0 0
    %718 = vperm.xlu0 %717, %v710
    %v719 = vpop.permute.xlu0 %718
    %v722 = vsel %vm184, %v706, 0
    %v725 = vsel %vm184, %v708, 0
    %727 = vmatpush.msra.mxu0 %v686
    %728 = vmatpush.msra.mxu0 %v685
    %729 = vmatpush.msra.mxu0 %v672
    %730 = vmatpush.msra.mxu0 %v671
    %731 = vmatpush.msra.mxu0 %v658
    %732 = vmatpush.msra.mxu0 %v657
    %733 = vmatpush.msra.mxu0 %v644
    %734 = vmatpush.msra.mxu0 %v643
    %735 = vmatpush.msra.mxu0 %v630
    %736 = vmatpush.msra.mxu0 %v629
    %737 = vmatpush.msra.mxu0 %v616
    %738 = vmatpush.msra.mxu0 %v615
    %739 = vmatpush.msra.mxu0 %v602
    %740 = vmatpush.msra.mxu0 %v601
    %741 = vmatpush.msra.mxu0 %v587
    %742 = vmatpush.msra.mxu0 %v585
    %743 = vmatmul.f32.gmra.mxu0 %v705
    %v744 = vpop.f32.mrf.mxu0
    %v745 = vadd.f32 %v714, %v744
    %746 = vmatmul.f32.gmra.mxu0 %v707
    %v747 = vpop.f32.mrf.mxu0
    %v748 = vadd.f32 %v719, %v747
    %749 = vdwg.mxu0
    %750 = vmatpush.msra.mxu0 0.0
    %751 = vmatpush.msra.mxu0 0.0
    %752 = vmatpush.msra.mxu0 0.0
    %753 = vmatpush.msra.mxu0 0.0
    %754 = vmatpush.msra.mxu0 0.0
    %755 = vmatpush.msra.mxu0 0.0
    %756 = vmatpush.msra.mxu0 0.0
    %757 = vmatpush.msra.mxu0 0.0
    %758 = vmatpush.msra.mxu0 0.0
    %759 = vmatpush.msra.mxu0 0.0
    %760 = vmatpush.msra.mxu0 0.0
    %761 = vmatpush.msra.mxu0 0.0
    %762 = vmatpush.msra.mxu0 0.0
    %763 = vmatpush.msra.mxu0 0.0
    %764 = vmatpush.msra.mxu0 %v700
    %765 = vmatpush.msra.mxu0 %v699
    %766 = vmatmul.f32.gmra.mxu0 %v722
    %v767 = vpop.f32.mrf.mxu0
    %v768 = vadd.f32 %v745, %v767
    %769 = vmatmul.f32.gmra.mxu0 %v725
    %v770 = vpop.f32.mrf.mxu0
    %v771 = vadd.f32 %v748, %v770
    %772 = vdwg.mxu0
    %773 = vmatpush.msra.mxu0 %v684
    %774 = vmatpush.msra.mxu0 %v680
    %775 = vmatpush.msra.mxu0 %v670
    %776 = vmatpush.msra.mxu0 %v666
    %777 = vmatpush.msra.mxu0 %v656
    %778 = vmatpush.msra.mxu0 %v652
    %779 = vmatpush.msra.mxu0 %v642
    %780 = vmatpush.msra.mxu0 %v638
    %781 = vmatpush.msra.mxu0 %v628
    %782 = vmatpush.msra.mxu0 %v624
    %783 = vmatpush.msra.mxu0 %v614
    %784 = vmatpush.msra.mxu0 %v610
    %785 = vmatpush.msra.mxu0 %v600
    %786 = vmatpush.msra.mxu0 %v596
    %787 = vmatpush.msra.mxu0 %v588
    %788 = vmatpush.msra.mxu0 %v586
    %789 = vmatmul.f32.gmra.mxu0 %v705
    %v790 = vpop.f32.mrf.mxu0
    %v791 = vadd.f32 %v714, %v790
    %792 = vmatmul.f32.gmra.mxu0 %v707
    %v793 = vpop.f32.mrf.mxu0
    %v794 = vadd.f32 %v719, %v793
    %795 = vdwg.mxu0
    %796 = vmatpush.msra.mxu0 0.0
    %797 = vmatpush.msra.mxu0 0.0
    %798 = vmatpush.msra.mxu0 0.0
    %799 = vmatpush.msra.mxu0 0.0
    %800 = vmatpush.msra.mxu0 0.0
    %801 = vmatpush.msra.mxu0 0.0
    %802 = vmatpush.msra.mxu0 0.0
    %803 = vmatpush.msra.mxu0 0.0
    %804 = vmatpush.msra.mxu0 0.0
    %805 = vmatpush.msra.mxu0 0.0
    %806 = vmatpush.msra.mxu0 0.0
    %807 = vmatpush.msra.mxu0 0.0
    %808 = vmatpush.msra.mxu0 0.0
    %809 = vmatpush.msra.mxu0 0.0
    %810 = vmatpush.msra.mxu0 %v698
    %811 = vmatpush.msra.mxu0 %v694
    %812 = vmatmul.f32.gmra.mxu0 %v722
    %v813 = vpop.f32.mrf.mxu0
    %v814 = vadd.f32 %v791, %v813
    %815 = vmatmul.f32.gmra.mxu0 %v725
    %v816 = vpop.f32.mrf.mxu0
    %v817 = vadd.f32 %v794, %v816
    %818 = vdwg.mxu0
    %v819 = vmax.f32 %v768, 0.0
    %v820 = vmax.f32 %v814, 0.0
    %v821 = vmax.f32 %v771, 0.0
    %v822 = vmax.f32 %v817, 0.0
    %v823 = vld [vmem:[%s5] sm:$0xff]
    %v824 = vld [vmem:[%s5 + $0x8] sm:$0xff]
    %v825 = vld [vmem:[%s5 + $0x10] sm:$0xff]
    %v826 = vld [vmem:[%s5 + $0x18] sm:$0xff]
    %v827 = vld [vmem:[%s5 + $0x20] sm:$0xff]
    %v828 = vld [vmem:[%s5 + $0x28] sm:$0xff]
    %v829 = vld [vmem:[%s5 + $0x30] sm:$0xff]
    %v830 = vld [vmem:[%s5 + $0x38] sm:$0xff]
    %v831 = vld [vmem:[%s5 + $0x40] sm:$0xff]
    %v832 = vld [vmem:[%s5 + $0x48] sm:$0xff]
    %v833 = vld [vmem:[%s5 + $0x50] sm:$0xff]
    %v834 = vld [vmem:[%s5 + $0x58] sm:$0xff]
    %v835 = vld [vmem:[%s5 + $0x60] sm:$0xff]
    %v836 = vld [vmem:[%s5 + $0x68] sm:$0xff]
    %v837 = vld [vmem:[%s5 + $0x70] sm:$0xff]
    %v838 = vld [vmem:[%s5 + $0x78] sm:$0xff]
    %v839 = vld [vmem:[%s5 + $0x80] sm:$0xff]
    %v840 = vld [vmem:[%s5 + $0x88] sm:$0xff]
    %v841 = vld [vmem:[%s5 + $0x90] sm:$0xff]
    %v842 = vld [vmem:[%s5 + $0x98] sm:$0xff]
    %v843 = vmul.f32 %v819, %v823
    %v844 = vmul.f32 %v821, %v824
    %v845 = vmul.f32 %v819, %v825
    %v846 = vmul.f32 %v821, %v826
    %v847 = vmul.f32 %v819, %v827
    %v848 = vmul.f32 %v821, %v828
    %v849 = vmul.f32 %v819, %v829
    %v850 = vmul.f32 %v821, %v830
    %v851 = vmul.f32 %v819, %v831
    %v852 = vmul.f32 %v821, %v832
    %v853 = vmul.f32 %v819, %v833
    %v854 = vmul.f32 %v821, %v834
    %v855 = vmul.f32 %v819, %v835
    %v856 = vmul.f32 %v821, %v836
    %v857 = vmul.f32 %v819, %v837
    %v858 = vmul.f32 %v821, %v838
    %v859 = vmul.f32 %v819, %v839
    %v860 = vmul.f32 %v821, %v840
    %v861 = vmul.f32 %v819, %v841
    %v862 = vmul.f32 %v821, %v842
    %vm863 = vcmask 818176
    %v864 = vsel %vm863, %v843, 0.0
    %865 = vadd.xlane.f32.xlu0 %v864
    %v866 = vpop.xlane.xlu0 %865
    %v867 = vsel %vm863, %v844, 0.0
    %868 = vadd.xlane.f32.xlu0 %v867
    %v869 = vpop.xlane.xlu0 %868
    %v870 = vsel %vm863, %v845, 0.0
    %871 = vadd.xlane.f32.xlu0 %v870
    %v872 = vpop.xlane.xlu0 %871
    %v873 = vsel %vm863, %v846, 0.0
    %874 = vadd.xlane.f32.xlu0 %v873
    %v875 = vpop.xlane.xlu0 %874
    %v876 = vsel %vm863, %v847, 0.0
    %877 = vadd.xlane.f32.xlu0 %v876
    %v878 = vpop.xlane.xlu0 %877
    %v879 = vsel %vm863, %v848, 0.0
    %880 = vadd.xlane.f32.xlu0 %v879
    %v881 = vpop.xlane.xlu0 %880
    %v882 = vsel %vm863, %v849, 0.0
    %883 = vadd.xlane.f32.xlu0 %v882
    %v884 = vpop.xlane.xlu0 %883
    %v885 = vsel %vm863, %v850, 0.0
    %886 = vadd.xlane.f32.xlu0 %v885
    %v887 = vpop.xlane.xlu0 %886
    %v888 = vsel %vm863, %v851, 0.0
    %889 = vadd.xlane.f32.xlu0 %v888
    %v890 = vpop.xlane.xlu0 %889
    %v891 = vsel %vm863, %v852, 0.0
    %892 = vadd.xlane.f32.xlu0 %v891
    %v893 = vpop.xlane.xlu0 %892
    %v894 = vsel %vm863, %v853, 0.0
    %895 = vadd.xlane.f32.xlu0 %v894
    %v896 = vpop.xlane.xlu0 %895
    %v897 = vsel %vm863, %v854, 0.0
    %898 = vadd.xlane.f32.xlu0 %v897
    %v899 = vpop.xlane.xlu0 %898
    %v900 = vsel %vm863, %v855, 0.0
    %901 = vadd.xlane.f32.xlu0 %v900
    %v902 = vpop.xlane.xlu0 %901
    %v903 = vsel %vm863, %v856, 0.0
    %904 = vadd.xlane.f32.xlu0 %v903
    %v905 = vpop.xlane.xlu0 %904
    %v906 = vsel %vm863, %v857, 0.0
    %907 = vadd.xlane.f32.xlu0 %v906
    %v908 = vpop.xlane.xlu0 %907
    %v909 = vsel %vm863, %v858, 0.0
    %910 = vadd.xlane.f32.xlu0 %v909
    %v911 = vpop.xlane.xlu0 %910
    %v912 = vsel %vm863, %v859, 0.0
    %913 = vadd.xlane.f32.xlu0 %v912
    %v914 = vpop.xlane.xlu0 %913
    %v915 = vsel %vm863, %v860, 0.0
    %916 = vadd.xlane.f32.xlu0 %v915
    %v917 = vpop.xlane.xlu0 %916
    %v918 = vsel %vm863, %v861, 0.0
    %919 = vadd.xlane.f32.xlu0 %v918
    %v920 = vpop.xlane.xlu0 %919
    %v921 = vsel %vm863, %v862, 0.0
    %922 = vadd.xlane.f32.xlu0 %v921
    %v923 = vpop.xlane.xlu0 %922
    %v944 = vlaneseq
    %v945 = vand.u32 %v944, 127
    %v946 = vperm.slane %v866, %v945
    %v947 = vadd.s32 %v945, 4294967288
    %v948 = vperm.slane %v869, %v947
    %vm949 = vcmask 130112
    %v950 = vsel %vm949, %v948, %v946
    %v951 = vperm.slane %v872, %v945
    %v952 = vperm.slane %v875, %v947
    %v953 = vsel %vm949, %v952, %v951
    %v954 = vperm.slane %v878, %v945
    %v955 = vperm.slane %v881, %v947
    %v956 = vsel %vm949, %v955, %v954
    %v957 = vperm.slane %v884, %v945
    %v958 = vperm.slane %v887, %v947
    %v959 = vsel %vm949, %v958, %v957
    %v960 = vperm.slane %v890, %v945
    %v961 = vperm.slane %v893, %v947
    %v962 = vsel %vm949, %v961, %v960
    %v963 = vperm.slane %v896, %v945
    %v964 = vperm.slane %v899, %v947
    %v965 = vsel %vm949, %v964, %v963
    %v966 = vperm.slane %v902, %v945
    %v967 = vperm.slane %v905, %v947
    %v968 = vsel %vm949, %v967, %v966
    %v969 = vperm.slane %v908, %v945
    %v970 = vperm.slane %v911, %v947
    %v971 = vsel %vm949, %v970, %v969
    %v972 = vperm.slane %v914, %v945
    %v973 = vperm.slane %v917, %v947
    %v974 = vsel %vm949, %v973, %v972
    %v975 = vperm.slane %v920, %v945
    %v976 = vperm.slane %v923, %v947
    %v977 = vsel %vm949, %v976, %v975
    %vm978 = vcmask 1041409
    %v979 = vsel %vm978, %v953, %v950
    %vm980 = vcmask 1042434
    %v981 = vsel %vm980, %v956, %v979
    %vm982 = vcmask 1043459
    %v983 = vsel %vm982, %v959, %v981
    %vm984 = vcmask 1044484
    %v985 = vsel %vm984, %v962, %v983
    %vm986 = vcmask 1045509
    %v987 = vsel %vm986, %v965, %v985
    %vm988 = vcmask 1046534
    %v989 = vsel %vm988, %v968, %v987
    %vm990 = vcmask 1047559
    %v991 = vsel %vm990, %v971, %v989
    %v992 = vsel %vm978, %v977, %v974
    %v995 = vsel %vm184, %v991, 0.0
    %996 = vadd.xlane.f32.xlu0 %v995
    %v997 = vpop.xlane.xlu0 %996
    %vm998 = vcmask 123904
    %v999 = vsel %vm998, %v992, 0.0
    %1000 = vadd.xlane.f32.xlu0 %v999
    %v1001 = vpop.xlane.xlu0 %1000
    %1022 = vrot.lane.b32.xlu0 %v823, 100
    %v1023 = vpop.permute.xlu0 %1022
    %1024 = vrot.lane.b32.xlu0 %v824, 100
    %v1025 = vpop.permute.xlu0 %1024
    %1026 = vrot.lane.b32.xlu0 %v825, 100
    %v1027 = vpop.permute.xlu0 %1026
    %1028 = vrot.lane.b32.xlu0 %v826, 100
    %v1029 = vpop.permute.xlu0 %1028
    %1030 = vrot.lane.b32.xlu0 %v827, 100
    %v1031 = vpop.permute.xlu0 %1030
    %1032 = vrot.lane.b32.xlu0 %v828, 100
    %v1033 = vpop.permute.xlu0 %1032
    %1034 = vrot.lane.b32.xlu0 %v829, 100
    %v1035 = vpop.permute.xlu0 %1034
    %1036 = vrot.lane.b32.xlu0 %v830, 100
    %v1037 = vpop.permute.xlu0 %1036
    %1038 = vrot.lane.b32.xlu0 %v831, 100
    %v1039 = vpop.permute.xlu0 %1038
    %1040 = vrot.lane.b32.xlu0 %v832, 100
    %v1041 = vpop.permute.xlu0 %1040
    %1042 = vrot.lane.b32.xlu0 %v833, 100
    %v1043 = vpop.permute.xlu0 %1042
    %1044 = vrot.lane.b32.xlu0 %v834, 100
    %v1045 = vpop.permute.xlu0 %1044
    %1046 = vrot.lane.b32.xlu0 %v835, 100
    %v1047 = vpop.permute.xlu0 %1046
    %1048 = vrot.lane.b32.xlu0 %v836, 100
    %v1049 = vpop.permute.xlu0 %1048
    %1050 = vrot.lane.b32.xlu0 %v837, 100
    %v1051 = vpop.permute.xlu0 %1050
    %1052 = vrot.lane.b32.xlu0 %v838, 100
    %v1053 = vpop.permute.xlu0 %1052
    %1054 = vrot.lane.b32.xlu0 %v839, 100
    %v1055 = vpop.permute.xlu0 %1054
    %1056 = vrot.lane.b32.xlu0 %v840, 100
    %v1057 = vpop.permute.xlu0 %1056
    %1058 = vrot.lane.b32.xlu0 %v841, 100
    %v1059 = vpop.permute.xlu0 %1058
    %1060 = vrot.lane.b32.xlu0 %v842, 100
    %v1061 = vpop.permute.xlu0 %1060
    %v1082 = vmul.f32 %v819, %v1023
    %v1083 = vmul.f32 %v820, %v1023
    %v1084 = vmul.f32 %v821, %v1025
    %v1085 = vmul.f32 %v822, %v1025
    %v1086 = vmul.f32 %v819, %v1027
    %v1087 = vmul.f32 %v820, %v1027
    %v1088 = vmul.f32 %v821, %v1029
    %v1089 = vmul.f32 %v822, %v1029
    %v1090 = vmul.f32 %v819, %v1031
    %v1091 = vmul.f32 %v820, %v1031
    %v1092 = vmul.f32 %v821, %v1033
    %v1093 = vmul.f32 %v822, %v1033
    %v1094 = vmul.f32 %v819, %v1035
    %v1095 = vmul.f32 %v820, %v1035
    %v1096 = vmul.f32 %v821, %v1037
    %v1097 = vmul.f32 %v822, %v1037
    %v1098 = vmul.f32 %v819, %v1039
    %v1099 = vmul.f32 %v820, %v1039
    %v1100 = vmul.f32 %v821, %v1041
    %v1101 = vmul.f32 %v822, %v1041
    %v1102 = vmul.f32 %v819, %v1043
    %v1103 = vmul.f32 %v820, %v1043
    %v1104 = vmul.f32 %v821, %v1045
    %v1105 = vmul.f32 %v822, %v1045
    %v1106 = vmul.f32 %v819, %v1047
    %v1107 = vmul.f32 %v820, %v1047
    %v1108 = vmul.f32 %v821, %v1049
    %v1109 = vmul.f32 %v822, %v1049
    %v1110 = vmul.f32 %v819, %v1051
    %v1111 = vmul.f32 %v820, %v1051
    %v1112 = vmul.f32 %v821, %v1053
    %v1113 = vmul.f32 %v822, %v1053
    %v1114 = vmul.f32 %v819, %v1055
    %v1115 = vmul.f32 %v820, %v1055
    %v1116 = vmul.f32 %v821, %v1057
    %v1117 = vmul.f32 %v822, %v1057
    %v1118 = vmul.f32 %v819, %v1059
    %v1119 = vmul.f32 %v820, %v1059
    %v1120 = vmul.f32 %v821, %v1061
    %v1121 = vmul.f32 %v822, %v1061
    %1162 = vrot.lane.b32.xlu0 %v1082, 28
    %v1163 = vpop.permute.xlu0 %1162
    %1164 = vrot.lane.b32.xlu0 %v1083, 28
    %v1165 = vpop.permute.xlu0 %1164
    %1166 = vrot.lane.b32.xlu0 %v1084, 28
    %v1167 = vpop.permute.xlu0 %1166
    %1168 = vrot.lane.b32.xlu0 %v1085, 28
    %v1169 = vpop.permute.xlu0 %1168
    %1170 = vrot.lane.b32.xlu0 %v1086, 28
    %v1171 = vpop.permute.xlu0 %1170
    %1172 = vrot.lane.b32.xlu0 %v1087, 28
    %v1173 = vpop.permute.xlu0 %1172
    %1174 = vrot.lane.b32.xlu0 %v1088, 28
    %v1175 = vpop.permute.xlu0 %1174
    %1176 = vrot.lane.b32.xlu0 %v1089, 28
    %v1177 = vpop.permute.xlu0 %1176
    %1178 = vrot.lane.b32.xlu0 %v1090, 28
    %v1179 = vpop.permute.xlu0 %1178
    %1180 = vrot.lane.b32.xlu0 %v1091, 28
    %v1181 = vpop.permute.xlu0 %1180
    %1182 = vrot.lane.b32.xlu0 %v1092, 28
    %v1183 = vpop.permute.xlu0 %1182
    %1184 = vrot.lane.b32.xlu0 %v1093, 28
    %v1185 = vpop.permute.xlu0 %1184
    %1186 = vrot.lane.b32.xlu0 %v1094, 28
    %v1187 = vpop.permute.xlu0 %1186
    %1188 = vrot.lane.b32.xlu0 %v1095, 28
    %v1189 = vpop.permute.xlu0 %1188
    %1190 = vrot.lane.b32.xlu0 %v1096, 28
    %v1191 = vpop.permute.xlu0 %1190
    %1192 = vrot.lane.b32.xlu0 %v1097, 28
    %v1193 = vpop.permute.xlu0 %1192
    %1194 = vrot.lane.b32.xlu0 %v1098, 28
    %v1195 = vpop.permute.xlu0 %1194
    %1196 = vrot.lane.b32.xlu0 %v1099, 28
    %v1197 = vpop.permute.xlu0 %1196
    %1198 = vrot.lane.b32.xlu0 %v1100, 28
    %v1199 = vpop.permute.xlu0 %1198
    %1200 = vrot.lane.b32.xlu0 %v1101, 28
    %v1201 = vpop.permute.xlu0 %1200
    %1202 = vrot.lane.b32.xlu0 %v1102, 28
    %v1203 = vpop.permute.xlu0 %1202
    %1204 = vrot.lane.b32.xlu0 %v1103, 28
    %v1205 = vpop.permute.xlu0 %1204
    %1206 = vrot.lane.b32.xlu0 %v1104, 28
    %v1207 = vpop.permute.xlu0 %1206
    %1208 = vrot.lane.b32.xlu0 %v1105, 28
    %v1209 = vpop.permute.xlu0 %1208
    %1210 = vrot.lane.b32.xlu0 %v1106, 28
    %v1211 = vpop.permute.xlu0 %1210
    %1212 = vrot.lane.b32.xlu0 %v1107, 28
    %v1213 = vpop.permute.xlu0 %1212
    %1214 = vrot.lane.b32.xlu0 %v1108, 28
    %v1215 = vpop.permute.xlu0 %1214
    %1216 = vrot.lane.b32.xlu0 %v1109, 28
    %v1217 = vpop.permute.xlu0 %1216
    %1218 = vrot.lane.b32.xlu0 %v1110, 28
    %v1219 = vpop.permute.xlu0 %1218
    %1220 = vrot.lane.b32.xlu0 %v1111, 28
    %v1221 = vpop.permute.xlu0 %1220
    %1222 = vrot.lane.b32.xlu0 %v1112, 28
    %v1223 = vpop.permute.xlu0 %1222
    %1224 = vrot.lane.b32.xlu0 %v1113, 28
    %v1225 = vpop.permute.xlu0 %1224
    %1226 = vrot.lane.b32.xlu0 %v1114, 28
    %v1227 = vpop.permute.xlu0 %1226
    %1228 = vrot.lane.b32.xlu0 %v1115, 28
    %v1229 = vpop.permute.xlu0 %1228
    %1230 = vrot.lane.b32.xlu0 %v1116, 28
    %v1231 = vpop.permute.xlu0 %1230
    %1232 = vrot.lane.b32.xlu0 %v1117, 28
    %v1233 = vpop.permute.xlu0 %1232
    %1234 = vrot.lane.b32.xlu0 %v1118, 28
    %v1235 = vpop.permute.xlu0 %1234
    %1236 = vrot.lane.b32.xlu0 %v1119, 28
    %v1237 = vpop.permute.xlu0 %1236
    %1238 = vrot.lane.b32.xlu0 %v1120, 28
    %v1239 = vpop.permute.xlu0 %1238
    %1240 = vrot.lane.b32.xlu0 %v1121, 28
    %v1241 = vpop.permute.xlu0 %1240
    %vm1242 = vcmask 228352
    %v1243 = vsel %vm1242, %v1163, %v1165
    %v1244 = vsel %vm1242, %v1167, %v1169
    %v1245 = vsel %vm1242, %v1171, %v1173
    %v1246 = vsel %vm1242, %v1175, %v1177
    %v1247 = vsel %vm1242, %v1179, %v1181
    %v1248 = vsel %vm1242, %v1183, %v1185
    %v1249 = vsel %vm1242, %v1187, %v1189
    %v1250 = vsel %vm1242, %v1191, %v1193
    %v1251 = vsel %vm1242, %v1195, %v1197
    %v1252 = vsel %vm1242, %v1199, %v1201
    %v1253 = vsel %vm1242, %v1203, %v1205
    %v1254 = vsel %vm1242, %v1207, %v1209
    %v1255 = vsel %vm1242, %v1211, %v1213
    %v1256 = vsel %vm1242, %v1215, %v1217
    %v1257 = vsel %vm1242, %v1219, %v1221
    %v1258 = vsel %vm1242, %v1223, %v1225
    %v1259 = vsel %vm1242, %v1227, %v1229
    %v1260 = vsel %vm1242, %v1231, %v1233
    %v1261 = vsel %vm1242, %v1235, %v1237
    %v1262 = vsel %vm1242, %v1239, %v1241
    %v1283 = vsel %vm863, %v1243, 0.0
    %1284 = vadd.xlane.f32.xlu0 %v1283
    %v1285 = vpop.xlane.xlu0 %1284
    %v1286 = vsel %vm863, %v1244, 0.0
    %1287 = vadd.xlane.f32.xlu0 %v1286
    %v1288 = vpop.xlane.xlu0 %1287
    %v1289 = vsel %vm863, %v1245, 0.0
    %1290 = vadd.xlane.f32.xlu0 %v1289
    %v1291 = vpop.xlane.xlu0 %1290
    %v1292 = vsel %vm863, %v1246, 0.0
    %1293 = vadd.xlane.f32.xlu0 %v1292
    %v1294 = vpop.xlane.xlu0 %1293
    %v1295 = vsel %vm863, %v1247, 0.0
    %1296 = vadd.xlane.f32.xlu0 %v1295
    %v1297 = vpop.xlane.xlu0 %1296
    %v1298 = vsel %vm863, %v1248, 0.0
    %1299 = vadd.xlane.f32.xlu0 %v1298
    %v1300 = vpop.xlane.xlu0 %1299
    %v1301 = vsel %vm863, %v1249, 0.0
    %1302 = vadd.xlane.f32.xlu0 %v1301
    %v1303 = vpop.xlane.xlu0 %1302
    %v1304 = vsel %vm863, %v1250, 0.0
    %1305 = vadd.xlane.f32.xlu0 %v1304
    %v1306 = vpop.xlane.xlu0 %1305
    %v1307 = vsel %vm863, %v1251, 0.0
    %1308 = vadd.xlane.f32.xlu0 %v1307
    %v1309 = vpop.xlane.xlu0 %1308
    %v1310 = vsel %vm863, %v1252, 0.0
    %1311 = vadd.xlane.f32.xlu0 %v1310
    %v1312 = vpop.xlane.xlu0 %1311
    %v1313 = vsel %vm863, %v1253, 0.0
    %1314 = vadd.xlane.f32.xlu0 %v1313
    %v1315 = vpop.xlane.xlu0 %1314
    %v1316 = vsel %vm863, %v1254, 0.0
    %1317 = vadd.xlane.f32.xlu0 %v1316
    %v1318 = vpop.xlane.xlu0 %1317
    %v1319 = vsel %vm863, %v1255, 0.0
    %1320 = vadd.xlane.f32.xlu0 %v1319
    %v1321 = vpop.xlane.xlu0 %1320
    %v1322 = vsel %vm863, %v1256, 0.0
    %1323 = vadd.xlane.f32.xlu0 %v1322
    %v1324 = vpop.xlane.xlu0 %1323
    %v1325 = vsel %vm863, %v1257, 0.0
    %1326 = vadd.xlane.f32.xlu0 %v1325
    %v1327 = vpop.xlane.xlu0 %1326
    %v1328 = vsel %vm863, %v1258, 0.0
    %1329 = vadd.xlane.f32.xlu0 %v1328
    %v1330 = vpop.xlane.xlu0 %1329
    %v1331 = vsel %vm863, %v1259, 0.0
    %1332 = vadd.xlane.f32.xlu0 %v1331
    %v1333 = vpop.xlane.xlu0 %1332
    %v1334 = vsel %vm863, %v1260, 0.0
    %1335 = vadd.xlane.f32.xlu0 %v1334
    %v1336 = vpop.xlane.xlu0 %1335
    %v1337 = vsel %vm863, %v1261, 0.0
    %1338 = vadd.xlane.f32.xlu0 %v1337
    %v1339 = vpop.xlane.xlu0 %1338
    %v1340 = vsel %vm863, %v1262, 0.0
    %1341 = vadd.xlane.f32.xlu0 %v1340
    %v1342 = vpop.xlane.xlu0 %1341
    %v1363 = vperm.slane %v1285, %v945
    %v1364 = vperm.slane %v1288, %v947
    %v1365 = vsel %vm949, %v1364, %v1363
    %v1366 = vperm.slane %v1291, %v945
    %v1367 = vperm.slane %v1294, %v947
    %v1368 = vsel %vm949, %v1367, %v1366
    %v1369 = vperm.slane %v1297, %v945
    %v1370 = vperm.slane %v1300, %v947
    %v1371 = vsel %vm949, %v1370, %v1369
    %v1372 = vperm.slane %v1303, %v945
    %v1373 = vperm.slane %v1306, %v947
    %v1374 = vsel %vm949, %v1373, %v1372
    %v1375 = vperm.slane %v1309, %v945
    %v1376 = vperm.slane %v1312, %v947
    %v1377 = vsel %vm949, %v1376, %v1375
    %v1378 = vperm.slane %v1315, %v945
    %v1379 = vperm.slane %v1318, %v947
    %v1380 = vsel %vm949, %v1379, %v1378
    %v1381 = vperm.slane %v1321, %v945
    %v1382 = vperm.slane %v1324, %v947
    %v1383 = vsel %vm949, %v1382, %v1381
    %v1384 = vperm.slane %v1327, %v945
    %v1385 = vperm.slane %v1330, %v947
    %v1386 = vsel %vm949, %v1385, %v1384
    %v1387 = vperm.slane %v1333, %v945
    %v1388 = vperm.slane %v1336, %v947
    %v1389 = vsel %vm949, %v1388, %v1387
    %v1390 = vperm.slane %v1339, %v945
    %v1391 = vperm.slane %v1342, %v947
    %v1392 = vsel %vm949, %v1391, %v1390
    %v1393 = vsel %vm978, %v1368, %v1365
    %v1394 = vsel %vm980, %v1371, %v1393
    %v1395 = vsel %vm982, %v1374, %v1394
    %v1396 = vsel %vm984, %v1377, %v1395
    %v1397 = vsel %vm986, %v1380, %v1396
    %v1398 = vsel %vm988, %v1383, %v1397
    %v1399 = vsel %vm990, %v1386, %v1398
    %v1400 = vsel %vm978, %v1392, %v1389
    %v1403 = vsel %vm184, %v1399, 0.0
    %1404 = vadd.xlane.f32.xlu0 %v1403
    %v1405 = vpop.xlane.xlu0 %1404
    %v1406 = vsel %vm998, %v1400, 0.0
    %1407 = vadd.xlane.f32.xlu0 %v1406
    %v1408 = vpop.xlane.xlu0 %1407
    %v1411 = vperm.slane %v997, %v945
    %v1412 = vperm.slane %v1001, %v947
    %v1413 = vsel %vm949, %v1412, %v1411
    %v1417 = vperm.slane %v1405, %v945
    %v1418 = vperm.slane %v1408, %v947
    %v1419 = vsel %vm949, %v1418, %v1417
    %vm1421 = vcmask 1040384
    %v1422 = vsel %vm1421, %v1413, %v1419
    %v1423 = vld [vmem:[%s6] sm:$0x1]
    %v1425 = vperm.slane %v1423, 0
    %v1427 = vadd.f32 %v1422, %v1425
    %vm1428 = vcmask 74752
    %1429 = vst.msk [vmem:[#allocation3] sm:$0x3] %vm1428, %v1427
    // Predicated region
    $region34: #{test_model_forward.1} parent=1 // pred_check
      _
    $region35: #{test_model_forward.1} parent=1 // pred_check_branch
      %1431 = sbr.rel (0) target = $region37
    $region36: #{test_model_forward.1} parent=1 // pred_region
      %1433 = vsyncadd [#allocation4], 0
      %s1435 = sshll.u32 [#allocation3], 4
      %s1436 = int_to_ptr.vmem [resolvable:$true] %s1435
      %s1437 = sshll.u32 %s8, 4
      %s1438 = int_to_ptr.hbm [resolvable:$true] %s1437
      %1440 = dma.vmem_to_hbm [thread:$0]  %s1436, 32, %s1438, [#allocation4]
    $region37: #{test_model_forward.1} parent=1 // pred_fallthru
      _
    // Predicated region
    $region38: #{test_model_forward.1} parent=1 // pred_check
      _
    $region39: #{test_model_forward.1} parent=1 // pred_check_branch
      %1442 = sbr.rel (0) target = $region41
    $region40: #{test_model_forward.1} parent=1 // pred_region
      %1444 = dma.done [#allocation4], 32
    $region41: #{test_model_forward.1} parent=1 // pred_fallthru
      _
    %1445 = vsyncpa [#allocation4], 1

</llo_original>
